<compile_context>
chip_gen: v6e
topology: v6e:2x2x1
jax: 0.10.0
libtpu: 0.0.40
codegen_flags: <defaults>
</compile_context>

<pallas_src>
import functools

import jax
import jax.numpy as jnp
from jax.experimental import pallas as pl
from jax.experimental.pallas import tpu as pltpu


def _round_up(n, m):
    return ((n + m - 1) // m) * m


def _silu(h):
    # Exact identity: sigmoid(h) = 0.5*(tanh(0.5*h)+1)  ->  EUP tanh, no divide.
    return h * (0.5 * (jnp.tanh(0.5 * h) + 1.0))


# ---------------------------------------------------------------------------
# Pallas kernel: full MLP hot path, batch-on-lanes layout.
#   x_ref   : (F, tile)          w1t_ref : (H, F)     b1_ref : (H, 1)
#   whT_ref : (n_hidden, H, H)   bh_ref  : (n_hidden, H, 1)
#   wn_ref  : (H, 1)             bn_ref  : (1, 1)     o_ref  : (1, tile)
# ---------------------------------------------------------------------------
def _value_approx_kernel(x_ref, w1t_ref, b1_ref,
                         whT_ref, bh_ref,
                         wn_ref, bn_ref,
                         o_ref, *, n_hidden_layers, n_features):
    x = x_ref[...]                                           # (F, tile), f32

    # Layer 1: K = n_features (=3) is far too small for the MXU; compute it
    # as outer-product broadcast-FMAs, result (H, tile) is lane-dense.
    h = w1t_ref[:, 0:1] * x[0:1, :] + b1_ref[...]            # (H, tile)
    for f in range(1, n_features):
        h = h + w1t_ref[:, f:f + 1] * x[f:f + 1, :]
    h = _silu(h)

    # Hidden layers, statically unrolled: (H,H) @ (H,tile) on the MXU with a
    # lane-dense result.
    for l in range(n_hidden_layers):
        h = jnp.dot(whT_ref[l], h, preferred_element_type=jnp.float32) \
            + bh_ref[l]
        h = _silu(h)

    # Output layer: N = 1 -> VPU multiply + sublane reduce, lane-dense store.
    y = jnp.sum(h * wn_ref[...], axis=0, keepdims=True) + bn_ref[...]  # (1,T)
    o_ref[...] = jnp.clip(y, -30.0, 30.0)


# ---------------------------------------------------------------------------
# Wrapper: fold normalization into layer 1, transpose to batch-on-lanes,
# pad batch to a multiple of the (128-aligned) tile, pallas_call.
# ---------------------------------------------------------------------------
def value_approx_forward(x, params, env_params, *, batch_tile=8192):
    B, F = x.shape
    H = params["w1"].shape[1]
    n_hidden = params["wh"].shape[0]

    # normalize_features is a per-feature affine (x*scale + shift); fold it
    # into the first linear layer: h = x @ (diag(scale) @ W1) + (shift@W1+b1).
    scale = jnp.array([2.0 / env_params["S0"],
                       1.0 / env_params["max_alpha"],
                       1.0 / env_params["Ndt"]], jnp.float32)        # (F,)
    shift = jnp.array([-1.0, 0.0, 0.0], jnp.float32)                 # (F,)
    w1 = params["w1"].astype(jnp.float32)
    w1t = (w1 * scale[:, None]).T                                    # (H, F)
    b1c = (shift @ w1 + params["b1"].astype(jnp.float32)).reshape(H, 1)

    # Hidden layers transposed so the kernel contracts over the sublane axis
    # and keeps the batch on the lane axis.
    whT = jnp.swapaxes(params["wh"].astype(jnp.float32), 1, 2)       # (L,H,H)
    bhc = params["bh"].astype(jnp.float32).reshape(n_hidden, H, 1)
    wnc = params["wn"].astype(jnp.float32).reshape(H, 1)
    bnc = params["bn"].astype(jnp.float32).reshape(1, 1)

    # Tile selection: big tiles amortize per-step overhead; keep lanes dense
    # (multiple of 128); when there is enough work, cap the tile so there are
    # at least two grid steps (v7x has two TensorCores).
    B_128 = _round_up(B, 128)
    tile = min(batch_tile, B_128)
    if B_128 >= 256:
        tile = min(tile, _round_up((B_128 + 1) // 2, 128))
    tile = max(128, (tile // 128) * 128)
    B_pad = _round_up(B, tile)

    # Transposed, padded input: (F, B_pad).  Layout plumbing only.
    x_t = x.astype(jnp.float32).T
    if B_pad != B:
        x_t = jnp.pad(x_t, ((0, 0), (0, B_pad - B)))
    grid = (B_pad // tile,)

    bcast2 = lambda shape: pl.BlockSpec(shape, lambda i: (0, 0))
    bcast3 = lambda shape: pl.BlockSpec(shape, lambda i: (0, 0, 0))

    kernel = functools.partial(_value_approx_kernel,
                               n_hidden_layers=n_hidden, n_features=F)

    out = pl.pallas_call(
        kernel,
        out_shape=jax.ShapeDtypeStruct((1, B_pad), jnp.float32),
        grid_spec=pltpu.PrefetchScalarGridSpec(
            num_scalar_prefetch=0,
            grid=grid,
            in_specs=[
                pl.BlockSpec((F, tile), lambda i: (0, i)),   # x (transposed)
                bcast2((H, F)),                              # w1^T (folded)
                bcast2((H, 1)),                              # b1  (folded)
                bcast3((n_hidden, H, H)),                    # hidden weights^T
                bcast3((n_hidden, H, 1)),                    # hidden biases
                bcast2((H, 1)),                              # wN (column)
                bcast2((1, 1)),                              # bN
            ],
            out_specs=pl.BlockSpec((1, tile), lambda i: (0, i)),
        ),
        compiler_params=pltpu.CompilerParams(
            dimension_semantics=("parallel",),
            vmem_limit_bytes=32 * 1024 * 1024),
    )(x_t, w1t, b1c, whT, bhc, wnc, bnc)

    return out[:, :B].T                                      # (B, 1)


# ---------------------------------------------------------------------------
# Pure-JAX reference for verification.
# ---------------------------------------------------------------------------
def value_approx_reference(x, params, env_params):
    x = x.astype(jnp.float32)
    x = x.at[..., 0].set(2.0 * x[..., 0] / env_params["S0"] - 1.0)
    x = x.at[..., 1].set(x[..., 1] / env_params["max_alpha"])
    x = x.at[..., 2].set(x[..., 2] / env_params["Ndt"])
    h = x @ params["w1"] + params["b1"]
    h = h * jax.nn.sigmoid(h)
    for l in range(params["wh"].shape[0]):
        h = h @ params["wh"][l] + params["bh"][l]
        h = h * jax.nn.sigmoid(h)
    y = h @ params["wn"] + params["bn"]
    return jnp.clip(y, -30.0, 30.0)


# ---------------------------------------------------------------------------
# Deterministic parameter init (PyTorch-Linear-style uniform ±1/sqrt(fan_in)).
# ---------------------------------------------------------------------------
def init_params(key, input_size, hidden_size, n_layers):
    n_hidden = n_layers - 1
    keys = jax.random.split(key, 6)

    def u(k, shape, fan_in):
        bound = 1.0 / jnp.sqrt(fan_in)
        return jax.random.uniform(k, shape, jnp.float32, -bound, bound)

    return {
        "w1": u(keys[0], (input_size, hidden_size), input_size),
        "b1": u(keys[1], (hidden_size,), input_size),
        "wh": u(keys[2], (n_hidden, hidden_size, hidden_size), hidden_size),
        "bh": u(keys[3], (n_hidden, hidden_size), hidden_size),
        "wn": u(keys[4], (hidden_size, 1), hidden_size),
        "bn": u(keys[5], (1,), hidden_size),
    }


if __name__ == "__main__":
    # Small shapes consistent with the module: 3 input features (S, alpha, t).
    input_size = 3
    hidden_size = 32
    n_layers = 3          # -> layer1 + 2 hidden layers + output layer

    env_params = {"S0": 100.0, "max_alpha": 5.0, "Ndt": 10.0}

    key = jax.random.PRNGKey(0)
    k_x, k_p = jax.random.split(key)
    params = init_params(k_p, input_size, hidden_size, n_layers)

    def make_inputs(k, batch):
        xs = jax.random.uniform(k, (batch, 1), jnp.float32, 80.0, 120.0)
        xa = jax.random.uniform(jax.random.fold_in(k, 1), (batch, 1),
                                jnp.float32, -5.0, 5.0)
        xt = jax.random.uniform(jax.random.fold_in(k, 2), (batch, 1),
                                jnp.float32, 0.0, 10.0)
        return jnp.concatenate([xs, xa, xt], axis=-1)

    def check(x, out, ref):
        assert out.shape == ref.shape
        assert jnp.allclose(out, ref, atol=1e-4, rtol=1e-5), (
            f"max abs diff {jnp.max(jnp.abs(out - ref))}")

    # Case 1: small batch (single grid step, tile = 128).
    x = make_inputs(k_x, 128)
    out = jax.block_until_ready(value_approx_forward(x, params, env_params))
    check(x, out, value_approx_reference(x, params, env_params))

    # Case 2: non-multiple-of-tile batch -> padding + multi-step grid.
    x2 = make_inputs(jax.random.fold_in(k_x, 7), 1000)
    out2 = jax.block_until_ready(
        value_approx_forward(x2, params, env_params, batch_tile=256))
    check(x2, out2, value_approx_reference(x2, params, env_params))

    # Case 3: default (large) tile path -> tile capped so grid has >= 2 steps.
    x3 = make_inputs(jax.random.fold_in(k_x, 11), 5000)
    out3 = jax.block_until_ready(value_approx_forward(x3, params, env_params))
    check(x3, out3, value_approx_reference(x3, params, env_params))

    print("KERNEL_OK")
</pallas_src>

<mosaic_0001>
module attributes {stable_mosaic.version = 11 : i64} {
  func.func @_value_approx_kernel(%arg0: i32, %arg1: memref<3x128xf32, #tpu.memory_space<vmem>>, %arg2: memref<32x3xf32, #tpu.memory_space<vmem>>, %arg3: memref<32x1xf32, #tpu.memory_space<vmem>>, %arg4: memref<2x32x32xf32, #tpu.memory_space<vmem>>, %arg5: memref<2x32x1xf32, #tpu.memory_space<vmem>>, %arg6: memref<32x1xf32, #tpu.memory_space<vmem>>, %arg7: memref<1x1xf32, #tpu.memory_space<vmem>>, %arg8: memref<1x128xf32, #tpu.memory_space<vmem>>) attributes {dimension_semantics = [#tpu.dimension_semantics<parallel>], iteration_bounds = array<i64: 1>, scalar_prefetch = 0 : i64, scratch_operands = 0 : i64, tpu.core_type = #tpu.core_type<tc>, window_params = [{transform_indices = @transform_0, window_bounds = array<i64: 3, 128>}, {pipeline_mode = #tpu.pipeline_mode<synchronous>, transform_indices = @transform_1, window_bounds = array<i64: 32, 3>}, {pipeline_mode = #tpu.pipeline_mode<synchronous>, transform_indices = @transform_2, window_bounds = array<i64: 32, 1>}, {pipeline_mode = #tpu.pipeline_mode<synchronous>, transform_indices = @transform_3, window_bounds = array<i64: 2, 32, 32>}, {pipeline_mode = #tpu.pipeline_mode<synchronous>, transform_indices = @transform_4, window_bounds = array<i64: 2, 32, 1>}, {pipeline_mode = #tpu.pipeline_mode<synchronous>, transform_indices = @transform_5, window_bounds = array<i64: 32, 1>}, {pipeline_mode = #tpu.pipeline_mode<synchronous>, transform_indices = @transform_6, window_bounds = array<i64: 1, 1>}, {transform_indices = @transform_7, window_bounds = array<i64: 1, 128>}]} {
    %c0 = arith.constant 0 : index
    %c0_0 = arith.constant 0 : index
    %0 = vector.load %arg1[%c0, %c0_0] : memref<3x128xf32, #tpu.memory_space<vmem>>, vector<3x128xf32>
    %c0_1 = arith.constant 0 : index
    %c0_2 = arith.constant 0 : index
    %1 = vector.load %arg2[%c0_1, %c0_2] : memref<32x3xf32, #tpu.memory_space<vmem>>, vector<32x1xf32>
    %2 = vector.extract_strided_slice %0 {offsets = [0, 0], sizes = [1, 128], strides = [1, 1]} : vector<3x128xf32> to vector<1x128xf32>
    %3 = vector.broadcast %1 : vector<32x1xf32> to vector<32x128xf32>
    %4 = vector.broadcast %2 : vector<1x128xf32> to vector<32x128xf32>
    %5 = arith.mulf %3, %4 : vector<32x128xf32>
    %c0_3 = arith.constant 0 : index
    %c0_4 = arith.constant 0 : index
    %6 = vector.load %arg3[%c0_3, %c0_4] : memref<32x1xf32, #tpu.memory_space<vmem>>, vector<32x1xf32>
    %7 = vector.broadcast %6 : vector<32x1xf32> to vector<32x128xf32>
    %8 = arith.addf %5, %7 : vector<32x128xf32>
    %c0_5 = arith.constant 0 : index
    %c1 = arith.constant 1 : index
    %9 = vector.load %arg2[%c0_5, %c1] : memref<32x3xf32, #tpu.memory_space<vmem>>, vector<32x1xf32>
    %10 = vector.extract_strided_slice %0 {offsets = [1, 0], sizes = [1, 128], strides = [1, 1]} : vector<3x128xf32> to vector<1x128xf32>
    %11 = vector.broadcast %9 : vector<32x1xf32> to vector<32x128xf32>
    %12 = vector.broadcast %10 : vector<1x128xf32> to vector<32x128xf32>
    %13 = arith.mulf %11, %12 : vector<32x128xf32>
    %14 = arith.addf %8, %13 : vector<32x128xf32>
    %c0_6 = arith.constant 0 : index
    %c2 = arith.constant 2 : index
    %15 = vector.load %arg2[%c0_6, %c2] : memref<32x3xf32, #tpu.memory_space<vmem>>, vector<32x1xf32>
    %16 = vector.extract_strided_slice %0 {offsets = [2, 0], sizes = [1, 128], strides = [1, 1]} : vector<3x128xf32> to vector<1x128xf32>
    %17 = vector.broadcast %15 : vector<32x1xf32> to vector<32x128xf32>
    %18 = vector.broadcast %16 : vector<1x128xf32> to vector<32x128xf32>
    %19 = arith.mulf %17, %18 : vector<32x128xf32>
    %20 = arith.addf %14, %19 : vector<32x128xf32>
    %cst = arith.constant 5.000000e-01 : f32
    %21 = vector.broadcast %cst : f32 to vector<32x128xf32>
    %22 = arith.mulf %21, %20 : vector<32x128xf32>
    %23 = math.tanh %22 : vector<32x128xf32>
    %cst_7 = arith.constant 1.000000e+00 : f32
    %24 = vector.broadcast %cst_7 : f32 to vector<32x128xf32>
    %25 = arith.addf %23, %24 : vector<32x128xf32>
    %cst_8 = arith.constant 5.000000e-01 : f32
    %26 = vector.broadcast %cst_8 : f32 to vector<32x128xf32>
    %27 = arith.mulf %26, %25 : vector<32x128xf32>
    %28 = arith.mulf %20, %27 : vector<32x128xf32>
    %c0_9 = arith.constant 0 : index
    %c0_10 = arith.constant 0 : index
    %c0_11 = arith.constant 0 : index
    %29 = vector.load %arg4[%c0_9, %c0_10, %c0_11] : memref<2x32x32xf32, #tpu.memory_space<vmem>>, vector<1x32x32xf32>
    %30 = vector.shape_cast %29 : vector<1x32x32xf32> to vector<32x32xf32>
    %cst_12 = arith.constant dense<0.000000e+00> : vector<32x128xf32>
    %31 = tpu.matmul %30, %28, %cst_12 {dimension_numbers = #tpu.dot_dimension_numbers<[1], [0], [0], [1], [0, 0, 1, 1], [], []>} : vector<32x32xf32>, vector<32x128xf32>, vector<32x128xf32> -> vector<32x128xf32>
    %c0_13 = arith.constant 0 : index
    %c0_14 = arith.constant 0 : index
    %c0_15 = arith.constant 0 : index
    %32 = vector.load %arg5[%c0_13, %c0_14, %c0_15] : memref<2x32x1xf32, #tpu.memory_space<vmem>>, vector<1x32x1xf32>
    %33 = vector.shape_cast %32 : vector<1x32x1xf32> to vector<32x1xf32>
    %34 = vector.broadcast %33 : vector<32x1xf32> to vector<32x128xf32>
    %35 = arith.addf %31, %34 : vector<32x128xf32>
    %cst_16 = arith.constant 5.000000e-01 : f32
    %36 = vector.broadcast %cst_16 : f32 to vector<32x128xf32>
    %37 = arith.mulf %36, %35 : vector<32x128xf32>
    %38 = math.tanh %37 : vector<32x128xf32>
    %cst_17 = arith.constant 1.000000e+00 : f32
    %39 = vector.broadcast %cst_17 : f32 to vector<32x128xf32>
    %40 = arith.addf %38, %39 : vector<32x128xf32>
    %cst_18 = arith.constant 5.000000e-01 : f32
    %41 = vector.broadcast %cst_18 : f32 to vector<32x128xf32>
    %42 = arith.mulf %41, %40 : vector<32x128xf32>
    %43 = arith.mulf %35, %42 : vector<32x128xf32>
    %c1_19 = arith.constant 1 : index
    %c0_20 = arith.constant 0 : index
    %c0_21 = arith.constant 0 : index
    %44 = vector.load %arg4[%c1_19, %c0_20, %c0_21] : memref<2x32x32xf32, #tpu.memory_space<vmem>>, vector<1x32x32xf32>
    %45 = vector.shape_cast %44 : vector<1x32x32xf32> to vector<32x32xf32>
    %cst_22 = arith.constant dense<0.000000e+00> : vector<32x128xf32>
    %46 = tpu.matmul %45, %43, %cst_22 {dimension_numbers = #tpu.dot_dimension_numbers<[1], [0], [0], [1], [0, 0, 1, 1], [], []>} : vector<32x32xf32>, vector<32x128xf32>, vector<32x128xf32> -> vector<32x128xf32>
    %c1_23 = arith.constant 1 : index
    %c0_24 = arith.constant 0 : index
    %c0_25 = arith.constant 0 : index
    %47 = vector.load %arg5[%c1_23, %c0_24, %c0_25] : memref<2x32x1xf32, #tpu.memory_space<vmem>>, vector<1x32x1xf32>
    %48 = vector.shape_cast %47 : vector<1x32x1xf32> to vector<32x1xf32>
    %49 = vector.broadcast %48 : vector<32x1xf32> to vector<32x128xf32>
    %50 = arith.addf %46, %49 : vector<32x128xf32>
    %cst_26 = arith.constant 5.000000e-01 : f32
    %51 = vector.broadcast %cst_26 : f32 to vector<32x128xf32>
    %52 = arith.mulf %51, %50 : vector<32x128xf32>
    %53 = math.tanh %52 : vector<32x128xf32>
    %cst_27 = arith.constant 1.000000e+00 : f32
    %54 = vector.broadcast %cst_27 : f32 to vector<32x128xf32>
    %55 = arith.addf %53, %54 : vector<32x128xf32>
    %cst_28 = arith.constant 5.000000e-01 : f32
    %56 = vector.broadcast %cst_28 : f32 to vector<32x128xf32>
    %57 = arith.mulf %56, %55 : vector<32x128xf32>
    %58 = arith.mulf %50, %57 : vector<32x128xf32>
    %c0_29 = arith.constant 0 : index
    %c0_30 = arith.constant 0 : index
    %59 = vector.load %arg6[%c0_29, %c0_30] : memref<32x1xf32, #tpu.memory_space<vmem>>, vector<32x1xf32>
    %60 = vector.broadcast %59 : vector<32x1xf32> to vector<32x128xf32>
    %61 = arith.mulf %58, %60 : vector<32x128xf32>
    %cst_31 = arith.constant dense<0.000000e+00> : vector<128xf32>
    %62 = vector.multi_reduction <add>, %61, %cst_31 [0] : vector<32x128xf32> to vector<128xf32>
    %63 = vector.shape_cast %62 : vector<128xf32> to vector<1x128xf32>
    %c0_32 = arith.constant 0 : index
    %c0_33 = arith.constant 0 : index
    %64 = vector.load %arg7[%c0_32, %c0_33] : memref<1x1xf32, #tpu.memory_space<vmem>>, vector<1x1xf32>
    %65 = vector.broadcast %64 : vector<1x1xf32> to vector<1x128xf32>
    %66 = arith.addf %63, %65 : vector<1x128xf32>
    %cst_34 = arith.constant -3.000000e+01 : f32
    %cst_35 = arith.constant 3.000000e+01 : f32
    %67 = vector.broadcast %cst_34 : f32 to vector<1x128xf32>
    %68 = arith.maximumf %67, %66 : vector<1x128xf32>
    %69 = vector.broadcast %cst_35 : f32 to vector<1x128xf32>
    %70 = arith.minimumf %69, %68 : vector<1x128xf32>
    %c0_36 = arith.constant 0 : index
    %c0_37 = arith.constant 0 : index
    %71 = vector.load %arg8[%c0_36, %c0_37] : memref<1x128xf32, #tpu.memory_space<vmem>>, vector<1x128xf32>
    tpu.vector_store %arg8[%c0_36, %c0_37], %70 {strides = array<i32>} : memref<1x128xf32, #tpu.memory_space<vmem>>, vector<1x128xf32>,
    return
  }
  func.func @transform_0(%arg0: i32) -> (i32, i32) {
    %c0_i32 = arith.constant 0 : i32
    %c0_i32_0 = arith.constant 0 : i32
    return %c0_i32, %arg0 : i32, i32
  }
  func.func @transform_1(%arg0: i32) -> (i32, i32) {
    %c0_i32 = arith.constant 0 : i32
    %c0_i32_0 = arith.constant 0 : i32
    %c0_i32_1 = arith.constant 0 : i32
    return %c0_i32, %c0_i32_0 : i32, i32
  }
  func.func @transform_2(%arg0: i32) -> (i32, i32) {
    %c0_i32 = arith.constant 0 : i32
    %c0_i32_0 = arith.constant 0 : i32
    %c0_i32_1 = arith.constant 0 : i32
    return %c0_i32, %c0_i32_0 : i32, i32
  }
  func.func @transform_3(%arg0: i32) -> (i32, i32, i32) {
    %c0_i32 = arith.constant 0 : i32
    %c0_i32_0 = arith.constant 0 : i32
    %c0_i32_1 = arith.constant 0 : i32
    %c0_i32_2 = arith.constant 0 : i32
    return %c0_i32, %c0_i32_0, %c0_i32_1 : i32, i32, i32
  }
  func.func @transform_4(%arg0: i32) -> (i32, i32, i32) {
    %c0_i32 = arith.constant 0 : i32
    %c0_i32_0 = arith.constant 0 : i32
    %c0_i32_1 = arith.constant 0 : i32
    %c0_i32_2 = arith.constant 0 : i32
    return %c0_i32, %c0_i32_0, %c0_i32_1 : i32, i32, i32
  }
  func.func @transform_5(%arg0: i32) -> (i32, i32) {
    %c0_i32 = arith.constant 0 : i32
    %c0_i32_0 = arith.constant 0 : i32
    %c0_i32_1 = arith.constant 0 : i32
    return %c0_i32, %c0_i32_0 : i32, i32
  }
  func.func @transform_6(%arg0: i32) -> (i32, i32) {
    %c0_i32 = arith.constant 0 : i32
    %c0_i32_0 = arith.constant 0 : i32
    %c0_i32_1 = arith.constant 0 : i32
    return %c0_i32, %c0_i32_0 : i32, i32
  }
  func.func @transform_7(%arg0: i32) -> (i32, i32) {
    %c0_i32 = arith.constant 0 : i32
    %c0_i32_0 = arith.constant 0 : i32
    return %c0_i32, %arg0 : i32, i32
  }
}

</mosaic_0001>

<llo_original>
// kernel: tpu_custom_call.1
$region0: #{tpu_custom_call.1}
  #allocation0 [shape = 'u32[]', space=smem, size = 0x4, offset = 0x4, fixed_abs, tag = 'smem constant byte address 0x4 - core index']
  #allocation1 [shape = 'u32[144,128]{1,0:T(1,128)}', space=vmem, size = 0x12000, scoped, tag = 'internal scratch']
  #allocation2 [shape = 'f32[1,1]{1,0:T(1,128)S(1)}', space=vmem, size = 0x200, scoped, tag = 'scoped memory for tpu_custom_call.1']
  %s0 = inlined_call_operand.vmem [shape: f32[3,128], index: 0, kind: input, shape index: {}]
  %s1 = inlined_call_operand.vmem [shape: f32[32,3], index: 1, kind: input, shape index: {}]
  %s2 = inlined_call_operand.vmem [shape: f32[32,1], index: 2, kind: input, shape index: {}]
  %s3 = inlined_call_operand.vmem [shape: f32[2,32,32], index: 3, kind: input, shape index: {}]
  %s4 = inlined_call_operand.vmem [shape: f32[2,32,1], index: 4, kind: input, shape index: {}]
  %s5 = inlined_call_operand.vmem [shape: f32[32,1], index: 5, kind: input, shape index: {}]
  %s6 = inlined_call_operand.<no memory space> [shape: f32[1,1], index: 6, kind: input, shape index: {}]
  %s7 = inlined_call_operand.hbm [shape: f32[1,128], index: 7, kind: output, shape index: {}]
  %s8 = sld [smem:[#allocation0]]
  $region38: #{tpu_custom_call.1} parent=0
    _
  %s10 = ssub.s32 1, %s8
  %s11 = scalar_select 0, %s10, %s8
  %v12 = vstv %s6
  %13 = vst [vmem:[#allocation2] sm:$0x1] %v12
  $region1: #{tpu_custom_call.1} parent=0
    #allocation3 [shape = 'u8[512]{0}', space=vmem, size = 0x400, scoped, tag = 'output window, operand 0, single buffered']
    #allocation4 [shape = 's32[1]{0}', space=sflag, size = 0x4, scoped, tag = 'scoped memory for tpu_custom_call.1']
    %14 = vsyncpa [#allocation4], 0
    // Predicated region
    $region2: #{tpu_custom_call.1} parent=1 // pred_check
      _
    $region3: #{tpu_custom_call.1} parent=1 // pred_check_branch
      %16 = sbr.rel (0) target = $region5
    $region4: #{tpu_custom_call.1} parent=1 // pred_region
      _
    $region5: #{tpu_custom_call.1} parent=1 // pred_fallthru
      _
    // Predicated region
    $region6: #{tpu_custom_call.1} parent=1 // pred_check
      _
    $region7: #{tpu_custom_call.1} parent=1 // pred_check_branch
      %18 = sbr.rel (0) target = $region9
    $region8: #{tpu_custom_call.1} parent=1 // pred_region
      _
    $region9: #{tpu_custom_call.1} parent=1 // pred_fallthru
      _
    // Predicated region
    $region10: #{tpu_custom_call.1} parent=1 // pred_check
      _
    $region11: #{tpu_custom_call.1} parent=1 // pred_check_branch
      %20 = sbr.rel (0) target = $region13
    $region12: #{tpu_custom_call.1} parent=1 // pred_region
      _
    $region13: #{tpu_custom_call.1} parent=1 // pred_fallthru
      _
    // Predicated region
    $region14: #{tpu_custom_call.1} parent=1 // pred_check
      _
    $region15: #{tpu_custom_call.1} parent=1 // pred_check_branch
      %22 = sbr.rel (0) target = $region17
    $region16: #{tpu_custom_call.1} parent=1 // pred_region
      _
    $region17: #{tpu_custom_call.1} parent=1 // pred_fallthru
      _
    // Predicated region
    $region18: #{tpu_custom_call.1} parent=1 // pred_check
      _
    $region19: #{tpu_custom_call.1} parent=1 // pred_check_branch
      %24 = sbr.rel (0) target = $region21
    $region20: #{tpu_custom_call.1} parent=1 // pred_region
      _
    $region21: #{tpu_custom_call.1} parent=1 // pred_fallthru
      _
    // Predicated region
    $region22: #{tpu_custom_call.1} parent=1 // pred_check
      _
    $region23: #{tpu_custom_call.1} parent=1 // pred_check_branch
      %26 = sbr.rel (0) target = $region25
    $region24: #{tpu_custom_call.1} parent=1 // pred_region
      _
    $region25: #{tpu_custom_call.1} parent=1 // pred_fallthru
      _
    // Predicated region
    $region26: #{tpu_custom_call.1} parent=1 // pred_check
      _
    $region27: #{tpu_custom_call.1} parent=1 // pred_check_branch
      %28 = sbr.rel (0) target = $region29
    $region28: #{tpu_custom_call.1} parent=1 // pred_region
      _
    $region29: #{tpu_custom_call.1} parent=1 // pred_fallthru
      _
    %v29 = vld [vmem:[%s0] sm:$0x7]
    %v30 = vld [vmem:[%s1] sm:$0xff]
    %v31 = vld [vmem:[%s1 + $0x8] sm:$0xff]
    %v32 = vld [vmem:[%s1 + $0x10] sm:$0xff]
    %v33 = vld [vmem:[%s1 + $0x18] sm:$0xff]
    %35 = vset.pattern.permute.xlu0 0
    %36 = vperm.xlu0 %35, %v30
    %v37 = vpop.permute.xlu0 %36
    %40 = vset.pattern.permute.xlu0 0
    %41 = vperm.xlu0 %40, %v31
    %v42 = vpop.permute.xlu0 %41
    %45 = vset.pattern.permute.xlu0 0
    %46 = vperm.xlu0 %45, %v32
    %v47 = vpop.permute.xlu0 %46
    %50 = vset.pattern.permute.xlu0 0
    %51 = vperm.xlu0 %50, %v33
    %v52 = vpop.permute.xlu0 %51
    %v54 = vlaneseq
    %v55 = vshrl.u32 %v54, 7
    %v56 = vsub.s32 0, %v55
    %v57 = vrot.slane %v29, %v56
    %v58 = vmul.f32 %v37, %v57
    %v59 = vmul.f32 %v42, %v57
    %v60 = vmul.f32 %v47, %v57
    %v61 = vmul.f32 %v52, %v57
    %v62 = vld [vmem:[%s2] sm:$0xff]
    %v63 = vld [vmem:[%s2 + $0x8] sm:$0xff]
    %v64 = vld [vmem:[%s2 + $0x10] sm:$0xff]
    %v65 = vld [vmem:[%s2 + $0x18] sm:$0xff]
    %67 = vset.pattern.permute.xlu0 0
    %68 = vperm.xlu0 %67, %v62
    %v69 = vpop.permute.xlu0 %68
    %72 = vset.pattern.permute.xlu0 0
    %73 = vperm.xlu0 %72, %v63
    %v74 = vpop.permute.xlu0 %73
    %77 = vset.pattern.permute.xlu0 0
    %78 = vperm.xlu0 %77, %v64
    %v79 = vpop.permute.xlu0 %78
    %82 = vset.pattern.permute.xlu0 0
    %83 = vperm.xlu0 %82, %v65
    %v84 = vpop.permute.xlu0 %83
    %v86 = vadd.f32 %v58, %v69
    %v87 = vadd.f32 %v59, %v74
    %v88 = vadd.f32 %v60, %v79
    %v89 = vadd.f32 %v61, %v84
    %90 = vset.pattern.permute.xlu0 1
    %91 = vperm.xlu0 %90, %v30
    %v92 = vpop.permute.xlu0 %91
    %94 = vset.pattern.permute.xlu0 1
    %95 = vperm.xlu0 %94, %v31
    %v96 = vpop.permute.xlu0 %95
    %98 = vset.pattern.permute.xlu0 1
    %99 = vperm.xlu0 %98, %v32
    %v100 = vpop.permute.xlu0 %99
    %102 = vset.pattern.permute.xlu0 1
    %103 = vperm.xlu0 %102, %v33
    %v104 = vpop.permute.xlu0 %103
    %v106 = vlaneseq
    %v107 = vshrl.u32 %v106, 7
    %v108 = vsub.s32 1, %v107
    %v109 = vrot.slane %v29, %v108
    %v110 = vmul.f32 %v92, %v109
    %v111 = vmul.f32 %v96, %v109
    %v112 = vmul.f32 %v100, %v109
    %v113 = vmul.f32 %v104, %v109
    %v114 = vadd.f32 %v86, %v110
    %v115 = vadd.f32 %v87, %v111
    %v116 = vadd.f32 %v88, %v112
    %v117 = vadd.f32 %v89, %v113
    %118 = vset.pattern.permute.xlu0 2
    %119 = vperm.xlu0 %118, %v30
    %v120 = vpop.permute.xlu0 %119
    %122 = vset.pattern.permute.xlu0 2
    %123 = vperm.xlu0 %122, %v31
    %v124 = vpop.permute.xlu0 %123
    %126 = vset.pattern.permute.xlu0 2
    %127 = vperm.xlu0 %126, %v32
    %v128 = vpop.permute.xlu0 %127
    %130 = vset.pattern.permute.xlu0 2
    %131 = vperm.xlu0 %130, %v33
    %v132 = vpop.permute.xlu0 %131
    %v134 = vlaneseq
    %v135 = vshrl.u32 %v134, 7
    %v136 = vsub.s32 2, %v135
    %v137 = vrot.slane %v29, %v136
    %v138 = vmul.f32 %v120, %v137
    %v139 = vmul.f32 %v124, %v137
    %v140 = vmul.f32 %v128, %v137
    %v141 = vmul.f32 %v132, %v137
    %v142 = vadd.f32 %v114, %v138
    %v143 = vadd.f32 %v115, %v139
    %v144 = vadd.f32 %v116, %v140
    %v145 = vadd.f32 %v117, %v141
    %v146 = vmul.f32 %v142, 0.5
    %v147 = vmul.f32 %v143, 0.5
    %v148 = vmul.f32 %v144, 0.5
    %v149 = vmul.f32 %v145, 0.5
    %v150 = vtanh.pop %v146
    %v151 = vtanh.pop %v147
    %v152 = vtanh.pop %v148
    %v153 = vtanh.pop %v149
    %v154 = vadd.f32 %v150, 1.0
    %v155 = vadd.f32 %v151, 1.0
    %v156 = vadd.f32 %v152, 1.0
    %v157 = vadd.f32 %v153, 1.0
    %v158 = vmul.f32 %v154, 0.5
    %v159 = vmul.f32 %v155, 0.5
    %v160 = vmul.f32 %v156, 0.5
    %v161 = vmul.f32 %v157, 0.5
    %v162 = vmul.f32 %v142, %v158
    %v163 = vmul.f32 %v143, %v159
    %v164 = vmul.f32 %v144, %v160
    %v165 = vmul.f32 %v145, %v161
    %v166 = vld [vmem:[%s3] sm:$0xff]
    %v167 = vld [vmem:[%s3 + $0x8] sm:$0xff]
    %v168 = vld [vmem:[%s3 + $0x10] sm:$0xff]
    %v169 = vld [vmem:[%s3 + $0x18] sm:$0xff]
    %v170 = vld [vmem:[%s4] sm:$0xff]
    %v171 = vld [vmem:[%s4 + $0x8] sm:$0xff]
    %v172 = vld [vmem:[%s4 + $0x10] sm:$0xff]
    %v173 = vld [vmem:[%s4 + $0x18] sm:$0xff]
    %175 = vset.pattern.permute.xlu0 0
    %176 = vperm.xlu0 %175, %v170
    %v177 = vpop.permute.xlu0 %176
    %180 = vset.pattern.permute.xlu0 0
    %181 = vperm.xlu0 %180, %v171
    %v182 = vpop.permute.xlu0 %181
    %185 = vset.pattern.permute.xlu0 0
    %186 = vperm.xlu0 %185, %v172
    %v187 = vpop.permute.xlu0 %186
    %190 = vset.pattern.permute.xlu0 0
    %191 = vperm.xlu0 %190, %v173
    %v192 = vpop.permute.xlu0 %191
    %vm194 = vcmask 261120
    %v196 = vsel %vm194, %v166, 0
    %v199 = vsel %vm194, %v167, 0
    %v202 = vsel %vm194, %v168, 0
    %v205 = vsel %vm194, %v169, 0
    %207 = vmatprep.subr.mxu0 0.0
    %208 = vmatpush1.msra.mxu0 0.0
    %209 = vmatprep.subr.mxu0 0.0
    %210 = vmatpush1.msra.mxu0 0.0
    %211 = vmatprep.subr.mxu0 0.0
    %212 = vmatpush1.msra.mxu0 0.0
    %213 = vmatprep.subr.mxu0 0.0
    %214 = vmatpush1.msra.mxu0 0.0
    %215 = vmatprep.subr.mxu0 0.0
    %216 = vmatpush1.msra.mxu0 0.0
    %217 = vmatprep.subr.mxu0 0.0
    %218 = vmatpush1.msra.mxu0 0.0
    %219 = vmatprep.subr.mxu0 0.0
    %220 = vmatpush1.msra.mxu0 0.0
    %221 = vmatprep.subr.mxu0 0.0
    %222 = vmatpush1.msra.mxu0 0.0
    %223 = vmatprep.subr.mxu0 0.0
    %224 = vmatpush1.msra.mxu0 0.0
    %225 = vmatprep.subr.mxu0 0.0
    %226 = vmatpush1.msra.mxu0 0.0
    %227 = vmatprep.subr.mxu0 0.0
    %228 = vmatpush1.msra.mxu0 0.0
    %229 = vmatprep.subr.mxu0 0.0
    %230 = vmatpush1.msra.mxu0 0.0
    %231 = vmatprep.subr.mxu0 0.0
    %232 = vmatpush1.msra.mxu0 %v165
    %233 = vmatprep.subr.mxu0 0.0
    %234 = vmatpush1.msra.mxu0 %v164
    %235 = vmatprep.subr.mxu0 0.0
    %236 = vmatpush1.msra.mxu0 %v163
    %237 = vmatprep.subr.mxu0 0.0
    %238 = vmatpush1.msra.mxu0 %v162
    %239 = vmatprep.subr.mxu0 0.0
    %240 = vmatpush2.msra.mxu0 0.0
    %241 = vmatprep.subr.mxu0 0.0
    %242 = vmatpush2.msra.mxu0 0.0
    %243 = vmatprep.subr.mxu0 0.0
    %244 = vmatpush2.msra.mxu0 0.0
    %245 = vmatprep.subr.mxu0 0.0
    %246 = vmatpush2.msra.mxu0 0.0
    %247 = vmatprep.subr.mxu0 0.0
    %248 = vmatpush2.msra.mxu0 0.0
    %249 = vmatprep.subr.mxu0 0.0
    %250 = vmatpush2.msra.mxu0 0.0
    %251 = vmatprep.subr.mxu0 0.0
    %252 = vmatpush2.msra.mxu0 0.0
    %253 = vmatprep.subr.mxu0 0.0
    %254 = vmatpush2.msra.mxu0 0.0
    %255 = vmatprep.subr.mxu0 0.0
    %256 = vmatpush2.msra.mxu0 0.0
    %257 = vmatprep.subr.mxu0 0.0
    %258 = vmatpush2.msra.mxu0 0.0
    %259 = vmatprep.subr.mxu0 0.0
    %260 = vmatpush2.msra.mxu0 0.0
    %261 = vmatprep.subr.mxu0 0.0
    %262 = vmatpush2.msra.mxu0 0.0
    %263 = vmatprep.subr.mxu0 0.0
    %264 = vmatpush2.msra.mxu0 0.0
    %265 = vmatprep.subr.mxu0 0.0
    %266 = vmatpush2.msra.mxu0 0.0
    %267 = vmatprep.subr.mxu0 0.0
    %268 = vmatpush2.msra.mxu0 0.0
    %269 = vmatprep.subr.mxu0 0.0
    %270 = vmatpush2.msra.mxu0 0.0
    %271 = vmatprep.mubr.f32.mxu0 0.0
    %272 = vmatmul.mubr.f32.gmra.mxu0 %v196
    %v273 = vpop.f32.mrf.mxu0
    %v274 = vadd.f32 %v177, %v273
    %v275 = vpop.f32.mrf.mxu0
    %276 = vmatprep.mubr.f32.mxu0 0.0
    %277 = vmatmul.mubr.f32.gmra.mxu0 %v199
    %v278 = vpop.f32.mrf.mxu0
    %v279 = vadd.f32 %v182, %v278
    %v280 = vpop.f32.mrf.mxu0
    %281 = vmatprep.mubr.f32.mxu0 0.0
    %282 = vmatmul.mubr.f32.gmra.mxu0 %v202
    %v283 = vpop.f32.mrf.mxu0
    %v284 = vadd.f32 %v187, %v283
    %v285 = vpop.f32.mrf.mxu0
    %286 = vmatprep.mubr.f32.mxu0 0.0
    %287 = vmatmul.mubr.f32.gmra.mxu0 %v205
    %v288 = vpop.f32.mrf.mxu0
    %v289 = vadd.f32 %v192, %v288
    %v290 = vpop.f32.mrf.mxu0
    %291 = vdwg.mxu0
    %v292 = vmul.f32 %v274, 0.5
    %v293 = vmul.f32 %v279, 0.5
    %v294 = vmul.f32 %v284, 0.5
    %v295 = vmul.f32 %v289, 0.5
    %v296 = vtanh.pop %v292
    %v297 = vtanh.pop %v293
    %v298 = vtanh.pop %v294
    %v299 = vtanh.pop %v295
    %v300 = vadd.f32 %v296, 1.0
    %v301 = vadd.f32 %v297, 1.0
    %v302 = vadd.f32 %v298, 1.0
    %v303 = vadd.f32 %v299, 1.0
    %v304 = vmul.f32 %v300, 0.5
    %v305 = vmul.f32 %v301, 0.5
    %v306 = vmul.f32 %v302, 0.5
    %v307 = vmul.f32 %v303, 0.5
    %v308 = vmul.f32 %v274, %v304
    %v309 = vmul.f32 %v279, %v305
    %v310 = vmul.f32 %v284, %v306
    %v311 = vmul.f32 %v289, %v307
    %s312 = scalar_lea.vmem %s3, 32
    %v313 = vld [vmem:[%s312] sm:$0xff]
    %v314 = vld [vmem:[%s312 + $0x8] sm:$0xff]
    %v315 = vld [vmem:[%s312 + $0x10] sm:$0xff]
    %v316 = vld [vmem:[%s312 + $0x18] sm:$0xff]
    %s317 = scalar_lea.vmem %s4, 32
    %v318 = vld [vmem:[%s317] sm:$0xff]
    %v319 = vld [vmem:[%s317 + $0x8] sm:$0xff]
    %v320 = vld [vmem:[%s317 + $0x10] sm:$0xff]
    %v321 = vld [vmem:[%s317 + $0x18] sm:$0xff]
    %323 = vset.pattern.permute.xlu0 0
    %324 = vperm.xlu0 %323, %v318
    %v325 = vpop.permute.xlu0 %324
    %328 = vset.pattern.permute.xlu0 0
    %329 = vperm.xlu0 %328, %v319
    %v330 = vpop.permute.xlu0 %329
    %333 = vset.pattern.permute.xlu0 0
    %334 = vperm.xlu0 %333, %v320
    %v335 = vpop.permute.xlu0 %334
    %338 = vset.pattern.permute.xlu0 0
    %339 = vperm.xlu0 %338, %v321
    %v340 = vpop.permute.xlu0 %339
    %v343 = vsel %vm194, %v313, 0
    %v346 = vsel %vm194, %v314, 0
    %v349 = vsel %vm194, %v315, 0
    %v352 = vsel %vm194, %v316, 0
    %354 = vmatprep.subr.mxu0 0.0
    %355 = vmatpush1.msra.mxu0 0.0
    %356 = vmatprep.subr.mxu0 0.0
    %357 = vmatpush1.msra.mxu0 0.0
    %358 = vmatprep.subr.mxu0 0.0
    %359 = vmatpush1.msra.mxu0 0.0
    %360 = vmatprep.subr.mxu0 0.0
    %361 = vmatpush1.msra.mxu0 0.0
    %362 = vmatprep.subr.mxu0 0.0
    %363 = vmatpush1.msra.mxu0 0.0
    %364 = vmatprep.subr.mxu0 0.0
    %365 = vmatpush1.msra.mxu0 0.0
    %366 = vmatprep.subr.mxu0 0.0
    %367 = vmatpush1.msra.mxu0 0.0
    %368 = vmatprep.subr.mxu0 0.0
    %369 = vmatpush1.msra.mxu0 0.0
    %370 = vmatprep.subr.mxu0 0.0
    %371 = vmatpush1.msra.mxu0 0.0
    %372 = vmatprep.subr.mxu0 0.0
    %373 = vmatpush1.msra.mxu0 0.0
    %374 = vmatprep.subr.mxu0 0.0
    %375 = vmatpush1.msra.mxu0 0.0
    %376 = vmatprep.subr.mxu0 0.0
    %377 = vmatpush1.msra.mxu0 0.0
    %378 = vmatprep.subr.mxu0 0.0
    %379 = vmatpush1.msra.mxu0 %v311
    %380 = vmatprep.subr.mxu0 0.0
    %381 = vmatpush1.msra.mxu0 %v310
    %382 = vmatprep.subr.mxu0 0.0
    %383 = vmatpush1.msra.mxu0 %v309
    %384 = vmatprep.subr.mxu0 0.0
    %385 = vmatpush1.msra.mxu0 %v308
    %386 = vmatprep.subr.mxu0 0.0
    %387 = vmatpush2.msra.mxu0 0.0
    %388 = vmatprep.subr.mxu0 0.0
    %389 = vmatpush2.msra.mxu0 0.0
    %390 = vmatprep.subr.mxu0 0.0
    %391 = vmatpush2.msra.mxu0 0.0
    %392 = vmatprep.subr.mxu0 0.0
    %393 = vmatpush2.msra.mxu0 0.0
    %394 = vmatprep.subr.mxu0 0.0
    %395 = vmatpush2.msra.mxu0 0.0
    %396 = vmatprep.subr.mxu0 0.0
    %397 = vmatpush2.msra.mxu0 0.0
    %398 = vmatprep.subr.mxu0 0.0
    %399 = vmatpush2.msra.mxu0 0.0
    %400 = vmatprep.subr.mxu0 0.0
    %401 = vmatpush2.msra.mxu0 0.0
    %402 = vmatprep.subr.mxu0 0.0
    %403 = vmatpush2.msra.mxu0 0.0
    %404 = vmatprep.subr.mxu0 0.0
    %405 = vmatpush2.msra.mxu0 0.0
    %406 = vmatprep.subr.mxu0 0.0
    %407 = vmatpush2.msra.mxu0 0.0
    %408 = vmatprep.subr.mxu0 0.0
    %409 = vmatpush2.msra.mxu0 0.0
    %410 = vmatprep.subr.mxu0 0.0
    %411 = vmatpush2.msra.mxu0 0.0
    %412 = vmatprep.subr.mxu0 0.0
    %413 = vmatpush2.msra.mxu0 0.0
    %414 = vmatprep.subr.mxu0 0.0
    %415 = vmatpush2.msra.mxu0 0.0
    %416 = vmatprep.subr.mxu0 0.0
    %417 = vmatpush2.msra.mxu0 0.0
    %418 = vmatprep.mubr.f32.mxu0 0.0
    %419 = vmatmul.mubr.f32.gmra.mxu0 %v343
    %v420 = vpop.f32.mrf.mxu0
    %v421 = vadd.f32 %v325, %v420
    %v422 = vpop.f32.mrf.mxu0
    %423 = vmatprep.mubr.f32.mxu0 0.0
    %424 = vmatmul.mubr.f32.gmra.mxu0 %v346
    %v425 = vpop.f32.mrf.mxu0
    %v426 = vadd.f32 %v330, %v425
    %v427 = vpop.f32.mrf.mxu0
    %428 = vmatprep.mubr.f32.mxu0 0.0
    %429 = vmatmul.mubr.f32.gmra.mxu0 %v349
    %v430 = vpop.f32.mrf.mxu0
    %v431 = vadd.f32 %v335, %v430
    %v432 = vpop.f32.mrf.mxu0
    %433 = vmatprep.mubr.f32.mxu0 0.0
    %434 = vmatmul.mubr.f32.gmra.mxu0 %v352
    %v435 = vpop.f32.mrf.mxu0
    %v436 = vadd.f32 %v340, %v435
    %v437 = vpop.f32.mrf.mxu0
    %438 = vdwg.mxu0
    %v439 = vmul.f32 %v421, 0.5
    %v440 = vmul.f32 %v426, 0.5
    %v441 = vmul.f32 %v431, 0.5
    %v442 = vmul.f32 %v436, 0.5
    %v443 = vtanh.pop %v439
    %v444 = vtanh.pop %v440
    %v445 = vtanh.pop %v441
    %v446 = vtanh.pop %v442
    %v447 = vadd.f32 %v443, 1.0
    %v448 = vadd.f32 %v444, 1.0
    %v449 = vadd.f32 %v445, 1.0
    %v450 = vadd.f32 %v446, 1.0
    %v451 = vmul.f32 %v447, 0.5
    %v452 = vmul.f32 %v448, 0.5
    %v453 = vmul.f32 %v449, 0.5
    %v454 = vmul.f32 %v450, 0.5
    %v455 = vmul.f32 %v421, %v451
    %v456 = vmul.f32 %v426, %v452
    %v457 = vmul.f32 %v431, %v453
    %v458 = vmul.f32 %v436, %v454
    %v459 = vld [vmem:[%s5] sm:$0xff]
    %v460 = vld [vmem:[%s5 + $0x8] sm:$0xff]
    %v461 = vld [vmem:[%s5 + $0x10] sm:$0xff]
    %v462 = vld [vmem:[%s5 + $0x18] sm:$0xff]
    %464 = vset.pattern.permute.xlu0 0
    %465 = vperm.xlu0 %464, %v459
    %v466 = vpop.permute.xlu0 %465
    %469 = vset.pattern.permute.xlu0 0
    %470 = vperm.xlu0 %469, %v460
    %v471 = vpop.permute.xlu0 %470
    %474 = vset.pattern.permute.xlu0 0
    %475 = vperm.xlu0 %474, %v461
    %v476 = vpop.permute.xlu0 %475
    %479 = vset.pattern.permute.xlu0 0
    %480 = vperm.xlu0 %479, %v462
    %v481 = vpop.permute.xlu0 %480
    %v483 = vmul.f32 %v455, %v466
    %v484 = vmul.f32 %v456, %v471
    %v485 = vmul.f32 %v457, %v476
    %v486 = vmul.f32 %v458, %v481
    %v487 = vadd.f32 %v483, %v484
    %v488 = vadd.f32 %v487, %v485
    %v489 = vadd.f32 %v488, %v486
    %v490 = vrot.slane %v489, 4
    %v491 = vadd.f32 %v489, %v490
    %v492 = vrot.slane %v491, 2
    %v493 = vadd.f32 %v491, %v492
    %v494 = vrot.slane %v493, 1
    %v495 = vadd.f32 %v493, %v494
    %v496 = vld [vmem:[#allocation2] sm:$0x1]
    %498 = vset.pattern.permute.xlu0 0
    %499 = vperm.xlu0 %498, %v496
    %v500 = vpop.permute.xlu0 %499
    %v502 = vlaneseq
    %v503 = vshrl.u32 %v502, 7
    %v504 = vsub.s32 0, %v503
    %v505 = vrot.slane %v500, %v504
    %v506 = vadd.f32 %v495, %v505
    %v507 = vmax.f32 %v506, -30.0
    %v508 = vmin.f32 %v507, 30.0
    %509 = vst [vmem:[#allocation3] sm:$0x1] %v508
    // Predicated region
    $region30: #{tpu_custom_call.1} parent=1 // pred_check
      _
    $region31: #{tpu_custom_call.1} parent=1 // pred_check_branch
      %511 = sbr.rel (0) target = $region33
    $region32: #{tpu_custom_call.1} parent=1 // pred_region
      %s513 = ssub.s32 16, 16
      %514 = vsyncadd [#allocation4], %s513
      %s516 = sshll.u32 [#allocation3], 4
      %s517 = int_to_ptr.vmem [resolvable:$true] %s516
      %519 = dma.vmem_to_hbm [thread:$0]  %s517, 16, %s7, [#allocation4]
    $region33: #{tpu_custom_call.1} parent=1 // pred_fallthru
      _
    // Predicated region
    $region34: #{tpu_custom_call.1} parent=1 // pred_check
      _
    $region35: #{tpu_custom_call.1} parent=1 // pred_check_branch
      %521 = sbr.rel (0) target = $region37
    $region36: #{tpu_custom_call.1} parent=1 // pred_region
      %522 = dma.done [#allocation4], 16
    $region37: #{tpu_custom_call.1} parent=1 // pred_fallthru
      _
    %523 = vsyncpa [#allocation4], 1

</llo_original>
